<compile_context>
chip_gen: v5e
topology: v5e:2x2
jax: 0.10.0
libtpu: 0.0.40
codegen_flags: <defaults>
</compile_context>

<pallas_src>
import functools

import jax
import jax.numpy as jnp
from jax.experimental import pallas as pl
from jax.experimental.pallas import tpu as pltpu


def _leaky_relu(x, slope=0.2):
    return jnp.where(x >= 0, x, slope * x)


# ---------------------------------------------------------------------------
# Stage 1: theta MLP   xt = (LeakyReLU(x @ W1 + b1)) @ W2 + b2   (stored bf16)
# ---------------------------------------------------------------------------
def theta_mlp_kernel(x_ref, w1_ref, b1_ref, w2_ref, b2_ref, xt_ref):
    h = jnp.dot(x_ref[...], w1_ref[...], preferred_element_type=jnp.float32)
    h = _leaky_relu(h + b1_ref[...])
    xt = jnp.dot(h, w2_ref[...], preferred_element_type=jnp.float32) + b2_ref[...]
    xt_ref[...] = xt.astype(xt_ref.dtype)          # bf16 store (halves stage-2 reads)


# ---------------------------------------------------------------------------
# Stage 2: propagation + fusion + activation
#   acc = A_fuse @ xt          (bf16 x bf16 MXU, f32 accumulate, k-tiled)
#   out = LeakyReLU(wf1 * acc + wf2 * xt)
# ---------------------------------------------------------------------------
def prop_fuse_kernel(wf_ref, a_ref, xtk_ref, xti_ref, o_ref, acc_ref):
    @pl.when(pl.program_id(1) == 0)
    def _():
        acc_ref[...] = jnp.zeros_like(acc_ref)

    acc_ref[...] += jnp.dot(a_ref[...], xtk_ref[...],
                            preferred_element_type=jnp.float32)

    @pl.when(pl.program_id(1) == pl.num_programs(1) - 1)
    def _():
        y = wf_ref[0] * acc_ref[...] + wf_ref[1] * xti_ref[...].astype(jnp.float32)
        o_ref[...] = _leaky_relu(y).astype(o_ref.dtype)


# ---------------------------------------------------------------------------
# Wrapper
# ---------------------------------------------------------------------------
def _round_up(n, m):
    return ((n + m - 1) // m) * m


@functools.partial(jax.jit, static_argnames=("c_out",))
def hgnng_conv_forward(x, w_param, W1p, b1p, W2p, b2p, A_fuse, *, c_out):
    V, C_in = x.shape
    HP = W1p.shape[1]   # padded hidden width (multiple of 128)
    CP = W2p.shape[1]   # padded output width (multiple of 128)

    # ---- static tile selection (shape-based, so resolved at trace time) ----
    if V <= 1024:
        # single full-extent tile on each axis; pad rows to a sublane multiple
        Vp = _round_up(V, 8)
        TM = TK = TM_MLP = Vp
    else:
        # large-V regime: big tiles to cut xt re-reads and amortize grid overhead.
        # bf16 A tile = 1 MiB; total double-buffered VMEM ~3.5 MiB (fits v7x 64 MiB).
        # Vp is a multiple of 1024 so Vp/TM is even -> clean megacore split on v7x.
        TM, TK, TM_MLP = 512, 1024, 512
        Vp = _round_up(V, 1024)

    # ---- zero-pad vertices so TM / TK divide exactly (reduction-tail fix) ----
    # Padded A_fuse rows/cols are zero, so padded xt rows (which carry the bias)
    # cannot leak into real rows through A @ xt; pad output rows are sliced off.
    if Vp != V:
        x = jnp.pad(x, ((0, Vp - V), (0, 0)))
        A_fuse = jnp.pad(A_fuse, ((0, Vp - V), (0, Vp - V)))

    # stable softmax over the 2-element fusion parameter (tiny, outside the kernels)
    wf = jax.nn.softmax(w_param).astype(jnp.float32)        # shape (2,)

    # ---- stage 1: theta MLP, row-tiled, computed once, bf16 output ----
    xt = pl.pallas_call(
        theta_mlp_kernel,
        out_shape=jax.ShapeDtypeStruct((Vp, CP), jnp.bfloat16),
        grid=(Vp // TM_MLP,),
        in_specs=[
            pl.BlockSpec((TM_MLP, C_in), lambda i: (i, 0)),   # x rows
            pl.BlockSpec((C_in, HP), lambda i: (0, 0)),       # W1 (padded cols)
            pl.BlockSpec((1, HP), lambda i: (0, 0)),          # b1
            pl.BlockSpec((HP, CP), lambda i: (0, 0)),         # W2 (padded)
            pl.BlockSpec((1, CP), lambda i: (0, 0)),          # b2
        ],
        out_specs=pl.BlockSpec((TM_MLP, CP), lambda i: (i, 0)),
        compiler_params=pltpu.CompilerParams(
            dimension_semantics=("parallel",)),
    )(x, W1p, b1p, W2p, b2p)

    # ---- stage 2: tiled (rows x reduction) propagation over bf16 A_fuse ----
    out_p = pl.pallas_call(
        prop_fuse_kernel,
        out_shape=jax.ShapeDtypeStruct((Vp, CP), jnp.float32),
        grid=(Vp // TM, Vp // TK),
        in_specs=[
            pl.BlockSpec(memory_space=pltpu.SMEM),            # w_fuse (2,)
            pl.BlockSpec((TM, TK), lambda i, k: (i, k)),      # A_fuse (bf16)
            pl.BlockSpec((TK, CP), lambda i, k: (k, 0)),      # xt reduction tile (bf16)
            pl.BlockSpec((TM, CP), lambda i, k: (i, 0)),      # xt skip/row tile (bf16)
        ],
        out_specs=pl.BlockSpec((TM, CP), lambda i, k: (i, 0)),
        scratch_shapes=[pltpu.VMEM((TM, CP), jnp.float32)],
        compiler_params=pltpu.CompilerParams(
            dimension_semantics=("parallel", "arbitrary"),
            vmem_limit_bytes=32 * 1024 * 1024),
    )(wf, A_fuse, xt, xt)

    # drop the zero-padded vertices and channels
    return out_p[:V, :c_out]


# ---------------------------------------------------------------------------
# Deterministic test setup
# ---------------------------------------------------------------------------
def _pad_to(a, shape):
    return jnp.pad(a, [(0, t - s) for s, t in zip(a.shape, shape)])


def _linear_init(key, fan_in, fan_out):
    # PyTorch-style uniform(-1/sqrt(fan_in), 1/sqrt(fan_in)) init, deterministic.
    kw, kb = jax.random.split(key)
    bound = 1.0 / jnp.sqrt(fan_in)
    W = jax.random.uniform(kw, (fan_in, fan_out), jnp.float32, -bound, bound)
    b = jax.random.uniform(kb, (1, fan_out), jnp.float32, -bound, bound)
    return W, b


def _build_structures(key, V, E):
    """Dense row-normalized v2v(mean) operators for the hypergraph and the graph."""
    k1, k2 = jax.random.split(key)
    # Hypergraph incidence H (V, E)
    H = (jax.random.uniform(k1, (V, E)) < 0.15).astype(jnp.float32)
    H = jnp.maximum(H, jnp.eye(V, E, dtype=jnp.float32))
    d_e = jnp.maximum(H.sum(axis=0), 1.0)
    d_v = jnp.maximum(H.sum(axis=1), 1.0)
    A_hg = (H / d_e[None, :]) @ H.T                 # H D_e^{-1} H^T
    A_hg = A_hg / d_v[:, None]                      # D_v^{-1} ...

    # Simple graph adjacency (symmetric, no self loops), neighbor-mean operator
    A = (jax.random.uniform(k2, (V, V)) < 0.1).astype(jnp.float32)
    A = jnp.maximum(A, A.T)
    A = A * (1.0 - jnp.eye(V, dtype=jnp.float32))
    ring = jnp.roll(jnp.eye(V, dtype=jnp.float32), 1, axis=1)
    A = jnp.maximum(A, jnp.maximum(ring, ring.T))
    deg = jnp.maximum(A.sum(axis=1), 1.0)
    A_g = A / deg[:, None]
    return A_hg, A_g


if __name__ == "__main__":
    V, E = 64, 32            # vertices, hyperedges
    C_in, C_out = 32, 16     # channels; hidden = C_in // 2 = 16
    hidden = C_in // 2

    root = jax.random.PRNGKey(0)
    kx, ks, k1, k2 = jax.random.split(root, 4)

    x = jax.random.normal(kx, (V, C_in), jnp.float32)
    A_hg, A_g = _build_structures(ks, V, E)

    W1, b1 = _linear_init(k1, C_in, hidden)          # theta[0]
    W2, b2 = _linear_init(k2, hidden, C_out)         # theta[2]
    w_param = jnp.ones((2,), jnp.float32)            # nn.Parameter(torch.ones(2))

    # --- one-time setup: pad channel dims to 128 lanes, pre-sum propagation op ---
    HP = _round_up(hidden, 128)
    CP = _round_up(C_out, 128)
    W1p = _pad_to(W1, (C_in, HP))
    b1p = _pad_to(b1, (1, HP))
    W2p = _pad_to(W2, (HP, CP))
    b2p = _pad_to(b2, (1, CP))
    A_fuse = (0.5 * (A_hg + A_g)).astype(jnp.bfloat16)   # single bf16 (V,V) operator

    out = hgnng_conv_forward(x, w_param, W1p, b1p, W2p, b2p, A_fuse, c_out=C_out)
    out = jax.block_until_ready(out)

    # reference check in plain JAX (original f32 semantics)
    def ref():
        e = jnp.exp(w_param)
        wf = e / e.sum()
        h = _leaky_relu(x @ W1 + b1)
        xt = h @ W2 + b2
        x_fuse = (A_g @ xt + A_hg @ xt) * 0.5
        return _leaky_relu(wf[0] * x_fuse + wf[1] * xt)

    assert out.shape == (V, C_out)
    # bf16 A_fuse + bf16 xt path -> relaxed tolerance vs. the f32 reference
    assert jnp.allclose(out, ref(), atol=2e-2, rtol=2e-2)
    print("KERNEL_OK")
</pallas_src>

<mosaic_0001>
module attributes {stable_mosaic.version = 11 : i64} {
  func.func @prop_fuse_kernel(%arg0: i32, %arg1: i32, %arg2: memref<2xf32, #tpu.memory_space<smem>>, %arg3: memref<64x64xbf16, #tpu.memory_space<vmem>>, %arg4: memref<64x128xbf16, #tpu.memory_space<vmem>>, %arg5: memref<64x128xbf16, #tpu.memory_space<vmem>>, %arg6: memref<64x128xf32, #tpu.memory_space<vmem>>, %arg7: memref<64x128xf32, #tpu.memory_space<vmem>>) attributes {dimension_semantics = [#tpu.dimension_semantics<parallel>, #tpu.dimension_semantics<arbitrary>], iteration_bounds = array<i64: 1, 1>, scalar_prefetch = 0 : i64, scratch_operands = 1 : i64, tpu.core_type = #tpu.core_type<tc>, window_params = [{transform_indices = @transform_0, window_bounds = array<i64: 2>}, {transform_indices = @transform_1, window_bounds = array<i64: 64, 64>}, {transform_indices = @transform_2, window_bounds = array<i64: 64, 128>}, {transform_indices = @transform_3, window_bounds = array<i64: 64, 128>}, {transform_indices = @transform_4, window_bounds = array<i64: 64, 128>}]} {
    %c0_i32 = arith.constant 0 : i32
    %0 = arith.cmpi eq, %arg1, %c0_i32 : i32
    %1 = arith.extui %0 : i1 to i32
    %c0_i32_0 = arith.constant 0 : i32
    %2 = arith.cmpi ne, %1, %c0_i32_0 : i32
    scf.if %2 {
      %cst_10 = arith.constant 0.000000e+00 : f32
      %12 = vector.broadcast %cst_10 : f32 to vector<64x128xf32>
      %c0_11 = arith.constant 0 : index
      %c0_12 = arith.constant 0 : index
      %13 = vector.load %arg7[%c0_11, %c0_12] : memref<64x128xf32, #tpu.memory_space<vmem>>, vector<64x128xf32>
      tpu.vector_store %arg7[%c0_11, %c0_12], %12 {strides = array<i32>} : memref<64x128xf32, #tpu.memory_space<vmem>>, vector<64x128xf32>,
    } else {
    }
    %c0 = arith.constant 0 : index
    %c0_1 = arith.constant 0 : index
    %3 = vector.load %arg7[%c0, %c0_1] : memref<64x128xf32, #tpu.memory_space<vmem>>, vector<64x128xf32>
    %c0_2 = arith.constant 0 : index
    %c0_3 = arith.constant 0 : index
    %4 = vector.load %arg3[%c0_2, %c0_3] : memref<64x64xbf16, #tpu.memory_space<vmem>>, vector<64x64xbf16>
    %c0_4 = arith.constant 0 : index
    %c0_5 = arith.constant 0 : index
    %5 = vector.load %arg4[%c0_4, %c0_5] : memref<64x128xbf16, #tpu.memory_space<vmem>>, vector<64x128xbf16>
    %cst = arith.constant dense<0.000000e+00> : vector<64x128xf32>
    %6 = tpu.matmul %4, %5, %cst {dimension_numbers = #tpu.dot_dimension_numbers<[1], [0], [0], [1], [0, 0, 1, 1], [], []>} : vector<64x64xbf16>, vector<64x128xbf16>, vector<64x128xf32> -> vector<64x128xf32>
    %7 = arith.addf %3, %6 : vector<64x128xf32>
    %c0_6 = arith.constant 0 : index
    %c0_7 = arith.constant 0 : index
    %8 = vector.load %arg7[%c0_6, %c0_7] : memref<64x128xf32, #tpu.memory_space<vmem>>, vector<64x128xf32>
    tpu.vector_store %arg7[%c0_6, %c0_7], %7 {strides = array<i32>} : memref<64x128xf32, #tpu.memory_space<vmem>>, vector<64x128xf32>,
    %c0_i32_8 = arith.constant 0 : i32
    %9 = arith.cmpi eq, %arg1, %c0_i32_8 : i32
    %10 = arith.extui %9 : i1 to i32
    %c0_i32_9 = arith.constant 0 : i32
    %11 = arith.cmpi ne, %10, %c0_i32_9 : i32
    scf.if %11 {
      %c0_10 = arith.constant 0 : index
      %12 = memref.load %arg2[%c0_10] : memref<2xf32, #tpu.memory_space<smem>>
      %c0_11 = arith.constant 0 : index
      %c0_12 = arith.constant 0 : index
      %13 = vector.load %arg7[%c0_11, %c0_12] : memref<64x128xf32, #tpu.memory_space<vmem>>, vector<64x128xf32>
      %14 = vector.broadcast %12 : f32 to vector<64x128xf32>
      %15 = arith.mulf %14, %13 : vector<64x128xf32>
      %c1 = arith.constant 1 : index
      %16 = memref.load %arg2[%c1] : memref<2xf32, #tpu.memory_space<smem>>
      %c0_13 = arith.constant 0 : index
      %c0_14 = arith.constant 0 : index
      %17 = vector.load %arg5[%c0_13, %c0_14] : memref<64x128xbf16, #tpu.memory_space<vmem>>, vector<64x128xbf16>
      %18 = arith.extf %17 : vector<64x128xbf16> to vector<64x128xf32>
      %19 = vector.broadcast %16 : f32 to vector<64x128xf32>
      %20 = arith.mulf %19, %18 : vector<64x128xf32>
      %21 = arith.addf %15, %20 : vector<64x128xf32>
      %cst_15 = arith.constant 0.000000e+00 : f32
      %22 = vector.broadcast %cst_15 : f32 to vector<64x128xf32>
      %23 = arith.cmpf oge, %21, %22 : vector<64x128xf32>
      %cst_16 = arith.constant 2.000000e-01 : f32
      %24 = vector.broadcast %cst_16 : f32 to vector<64x128xf32>
      %25 = arith.mulf %24, %21 : vector<64x128xf32>
      %26 = arith.select %23, %21, %25 : vector<64x128xi1>, vector<64x128xf32>
      %c0_17 = arith.constant 0 : index
      %c0_18 = arith.constant 0 : index
      %27 = vector.load %arg6[%c0_17, %c0_18] : memref<64x128xf32, #tpu.memory_space<vmem>>, vector<64x128xf32>
      tpu.vector_store %arg6[%c0_17, %c0_18], %26 {strides = array<i32>} : memref<64x128xf32, #tpu.memory_space<vmem>>, vector<64x128xf32>,
    } else {
    }
    return
  }
  func.func @transform_0(%arg0: i32, %arg1: i32) -> i32 {
    %c0_i32 = arith.constant 0 : i32
    %c0_i32_0 = arith.constant 0 : i32
    return %c0_i32 : i32
  }
  func.func @transform_1(%arg0: i32, %arg1: i32) -> (i32, i32) {
    %c0_i32 = arith.constant 0 : i32
    return %arg0, %arg1 : i32, i32
  }
  func.func @transform_2(%arg0: i32, %arg1: i32) -> (i32, i32) {
    %c0_i32 = arith.constant 0 : i32
    %c0_i32_0 = arith.constant 0 : i32
    return %arg1, %c0_i32 : i32, i32
  }
  func.func @transform_3(%arg0: i32, %arg1: i32) -> (i32, i32) {
    %c0_i32 = arith.constant 0 : i32
    %c0_i32_0 = arith.constant 0 : i32
    return %arg0, %c0_i32 : i32, i32
  }
  func.func @transform_4(%arg0: i32, %arg1: i32) -> (i32, i32) {
    %c0_i32 = arith.constant 0 : i32
    %c0_i32_0 = arith.constant 0 : i32
    return %arg0, %c0_i32 : i32, i32
  }
}

module attributes {stable_mosaic.version = 11 : i64} {
  func.func @theta_mlp_kernel(%arg0: i32, %arg1: memref<64x32xf32, #tpu.memory_space<vmem>>, %arg2: memref<32x128xf32, #tpu.memory_space<vmem>>, %arg3: memref<1x128xf32, #tpu.memory_space<vmem>>, %arg4: memref<128x128xf32, #tpu.memory_space<vmem>>, %arg5: memref<1x128xf32, #tpu.memory_space<vmem>>, %arg6: memref<64x128xbf16, #tpu.memory_space<vmem>>) attributes {dimension_semantics = [#tpu.dimension_semantics<parallel>], iteration_bounds = array<i64: 1>, scalar_prefetch = 0 : i64, scratch_operands = 0 : i64, tpu.core_type = #tpu.core_type<tc>, window_params = [{transform_indices = @transform_0, window_bounds = array<i64: 64, 32>}, {pipeline_mode = #tpu.pipeline_mode<synchronous>, transform_indices = @transform_1, window_bounds = array<i64: 32, 128>}, {pipeline_mode = #tpu.pipeline_mode<synchronous>, transform_indices = @transform_2, window_bounds = array<i64: 1, 128>}, {pipeline_mode = #tpu.pipeline_mode<synchronous>, transform_indices = @transform_3, window_bounds = array<i64: 128, 128>}, {pipeline_mode = #tpu.pipeline_mode<synchronous>, transform_indices = @transform_4, window_bounds = array<i64: 1, 128>}, {transform_indices = @transform_5, window_bounds = array<i64: 64, 128>}]} {
    %c0 = arith.constant 0 : index
    %c0_0 = arith.constant 0 : index
    %0 = vector.load %arg1[%c0, %c0_0] : memref<64x32xf32, #tpu.memory_space<vmem>>, vector<64x32xf32>
    %c0_1 = arith.constant 0 : index
    %c0_2 = arith.constant 0 : index
    %1 = vector.load %arg2[%c0_1, %c0_2] : memref<32x128xf32, #tpu.memory_space<vmem>>, vector<32x128xf32>
    %cst = arith.constant dense<0.000000e+00> : vector<64x128xf32>
    %2 = tpu.matmul %0, %1, %cst {dimension_numbers = #tpu.dot_dimension_numbers<[1], [0], [0], [1], [0, 0, 1, 1], [], []>} : vector<64x32xf32>, vector<32x128xf32>, vector<64x128xf32> -> vector<64x128xf32>
    %c0_3 = arith.constant 0 : index
    %c0_4 = arith.constant 0 : index
    %3 = vector.load %arg3[%c0_3, %c0_4] : memref<1x128xf32, #tpu.memory_space<vmem>>, vector<1x128xf32>
    %4 = vector.broadcast %3 : vector<1x128xf32> to vector<64x128xf32>
    %5 = arith.addf %2, %4 : vector<64x128xf32>
    %cst_5 = arith.constant 0.000000e+00 : f32
    %6 = vector.broadcast %cst_5 : f32 to vector<64x128xf32>
    %7 = arith.cmpf oge, %5, %6 : vector<64x128xf32>
    %cst_6 = arith.constant 2.000000e-01 : f32
    %8 = vector.broadcast %cst_6 : f32 to vector<64x128xf32>
    %9 = arith.mulf %8, %5 : vector<64x128xf32>
    %10 = arith.select %7, %5, %9 : vector<64x128xi1>, vector<64x128xf32>
    %c0_7 = arith.constant 0 : index
    %c0_8 = arith.constant 0 : index
    %11 = vector.load %arg4[%c0_7, %c0_8] : memref<128x128xf32, #tpu.memory_space<vmem>>, vector<128x128xf32>
    %cst_9 = arith.constant dense<0.000000e+00> : vector<64x128xf32>
    %12 = tpu.matmul %10, %11, %cst_9 {dimension_numbers = #tpu.dot_dimension_numbers<[1], [0], [0], [1], [0, 0, 1, 1], [], []>} : vector<64x128xf32>, vector<128x128xf32>, vector<64x128xf32> -> vector<64x128xf32>
    %c0_10 = arith.constant 0 : index
    %c0_11 = arith.constant 0 : index
    %13 = vector.load %arg5[%c0_10, %c0_11] : memref<1x128xf32, #tpu.memory_space<vmem>>, vector<1x128xf32>
    %14 = vector.broadcast %13 : vector<1x128xf32> to vector<64x128xf32>
    %15 = arith.addf %12, %14 : vector<64x128xf32>
    %16 = arith.truncf %15 : vector<64x128xf32> to vector<64x128xbf16>
    %c0_12 = arith.constant 0 : index
    %c0_13 = arith.constant 0 : index
    %17 = vector.load %arg6[%c0_12, %c0_13] : memref<64x128xbf16, #tpu.memory_space<vmem>>, vector<64x128xbf16>
    tpu.vector_store %arg6[%c0_12, %c0_13], %16 {strides = array<i32>} : memref<64x128xbf16, #tpu.memory_space<vmem>>, vector<64x128xbf16>,
    return
  }
  func.func @transform_0(%arg0: i32) -> (i32, i32) {
    %c0_i32 = arith.constant 0 : i32
    %c0_i32_0 = arith.constant 0 : i32
    return %arg0, %c0_i32 : i32, i32
  }
  func.func @transform_1(%arg0: i32) -> (i32, i32) {
    %c0_i32 = arith.constant 0 : i32
    %c0_i32_0 = arith.constant 0 : i32
    %c0_i32_1 = arith.constant 0 : i32
    return %c0_i32, %c0_i32_0 : i32, i32
  }
  func.func @transform_2(%arg0: i32) -> (i32, i32) {
    %c0_i32 = arith.constant 0 : i32
    %c0_i32_0 = arith.constant 0 : i32
    %c0_i32_1 = arith.constant 0 : i32
    return %c0_i32, %c0_i32_0 : i32, i32
  }
  func.func @transform_3(%arg0: i32) -> (i32, i32) {
    %c0_i32 = arith.constant 0 : i32
    %c0_i32_0 = arith.constant 0 : i32
    %c0_i32_1 = arith.constant 0 : i32
    return %c0_i32, %c0_i32_0 : i32, i32
  }
  func.func @transform_4(%arg0: i32) -> (i32, i32) {
    %c0_i32 = arith.constant 0 : i32
    %c0_i32_0 = arith.constant 0 : i32
    %c0_i32_1 = arith.constant 0 : i32
    return %c0_i32, %c0_i32_0 : i32, i32
  }
  func.func @transform_5(%arg0: i32) -> (i32, i32) {
    %c0_i32 = arith.constant 0 : i32
    %c0_i32_0 = arith.constant 0 : i32
    return %arg0, %c0_i32 : i32, i32
  }
}

</mosaic_0001>

<llo_original>
// kernel: hgnng_conv_forward.2
$region0: #{hgnng_conv_forward.2}
  #allocation0 [shape = 'u32[]', space=smem, size = 0x4, offset = 0x4, fixed_abs, tag = 'smem constant byte address 0x4 - core index']
  #allocation1 [shape = 'u32[72,128]{1,0:T(1,128)}', space=vmem, size = 0x9000, scoped, tag = 'internal scratch']
  %s0 = inlined_call_operand.vmem [shape: f32[64,32], index: 0, kind: input, shape index: {}]
  %s1 = inlined_call_operand.vmem [shape: f32[32,128], index: 1, kind: input, shape index: {}]
  %s2 = inlined_call_operand.vmem [shape: f32[1,128], index: 2, kind: input, shape index: {}]
  %s3 = inlined_call_operand.hbm [shape: f32[128,128], index: 3, kind: input, shape index: {}]
  %s4 = inlined_call_operand.vmem [shape: f32[1,128], index: 4, kind: input, shape index: {}]
  %s5 = inlined_call_operand.vmem [shape: bf16[64,128], index: 5, kind: output, shape index: {}]
  %s6 = sld [smem:[#allocation0]]
  $region34: #{hgnng_conv_forward.2} parent=0
    _
  %s8 = ssub.s32 1, %s6
  %s9 = scalar_select 0, %s8, %s6
  $region1: #{hgnng_conv_forward.2} parent=0
    #allocation2 [shape = 'u8[65536]{0}', space=vmem, size = 0x10000, scoped, tag = 'input window, operand 3, single buffered']
    #allocation3 [shape = 's32[1]{0}', space=sflag, size = 0x4, scoped, tag = 'scoped memory for hgnng_conv_forward.2']
    %10 = vsyncpa [#allocation3], 0
    // Predicated region
    $region2: #{hgnng_conv_forward.2} parent=1 // pred_check
      _
    $region3: #{hgnng_conv_forward.2} parent=1 // pred_check_branch
      %12 = sbr.rel (0) target = $region5
    $region4: #{hgnng_conv_forward.2} parent=1 // pred_region
      _
    $region5: #{hgnng_conv_forward.2} parent=1 // pred_fallthru
      _
    // Predicated region
    $region6: #{hgnng_conv_forward.2} parent=1 // pred_check
      _
    $region7: #{hgnng_conv_forward.2} parent=1 // pred_check_branch
      %14 = sbr.rel (0) target = $region9
    $region8: #{hgnng_conv_forward.2} parent=1 // pred_region
      _
    $region9: #{hgnng_conv_forward.2} parent=1 // pred_fallthru
      _
    // Predicated region
    $region10: #{hgnng_conv_forward.2} parent=1 // pred_check
      _
    $region11: #{hgnng_conv_forward.2} parent=1 // pred_check_branch
      %16 = sbr.rel (0) target = $region13
    $region12: #{hgnng_conv_forward.2} parent=1 // pred_region
      _
    $region13: #{hgnng_conv_forward.2} parent=1 // pred_fallthru
      _
    // Predicated region
    $region14: #{hgnng_conv_forward.2} parent=1 // pred_check
      _
    $region15: #{hgnng_conv_forward.2} parent=1 // pred_check_branch
      %18 = sbr.rel (0) target = $region17
    $region16: #{hgnng_conv_forward.2} parent=1 // pred_region
      %20 = vsyncadd [#allocation3], 0
      %s21 = sshll.u32 %s3, 4
      %s22 = int_to_ptr.hbm [resolvable:$true] %s21
      %s23 = sshll.u32 [#allocation2], 4
      %s24 = int_to_ptr.vmem [resolvable:$true] %s23
      %29 = dma.hbm_to_vmem [thread:$0]  %s22, 2048, %s24, [#allocation3], 128, 128, 8
    $region17: #{hgnng_conv_forward.2} parent=1 // pred_fallthru
      _
    // Predicated region
    $region18: #{hgnng_conv_forward.2} parent=1 // pred_check
      _
    $region19: #{hgnng_conv_forward.2} parent=1 // pred_check_branch
      %31 = sbr.rel (0) target = $region21
    $region20: #{hgnng_conv_forward.2} parent=1 // pred_region
      _
    $region21: #{hgnng_conv_forward.2} parent=1 // pred_fallthru
      _
    // Predicated region
    $region22: #{hgnng_conv_forward.2} parent=1 // pred_check
      _
    $region23: #{hgnng_conv_forward.2} parent=1 // pred_check_branch
      %33 = sbr.rel (0) target = $region25
    $region24: #{hgnng_conv_forward.2} parent=1 // pred_region
      %35 = dma.done [#allocation3], 2048
    $region25: #{hgnng_conv_forward.2} parent=1 // pred_fallthru
      _
    %v36 = vld [vmem:[%s0] sm:$0xff]
    %v37 = vld [vmem:[%s0 + $0x8] sm:$0xff]
    %v38 = vld [vmem:[%s0 + $0x10] sm:$0xff]
    %v39 = vld [vmem:[%s0 + $0x18] sm:$0xff]
    %v40 = vld [vmem:[%s0 + $0x20] sm:$0xff]
    %v41 = vld [vmem:[%s0 + $0x28] sm:$0xff]
    %v42 = vld [vmem:[%s0 + $0x30] sm:$0xff]
    %v43 = vld [vmem:[%s0 + $0x38] sm:$0xff]
    %v44 = vld [vmem:[%s1] sm:$0xff]
    %v45 = vld [vmem:[%s1 + $0x8] sm:$0xff]
    %v46 = vld [vmem:[%s1 + $0x10] sm:$0xff]
    %v47 = vld [vmem:[%s1 + $0x18] sm:$0xff]
    %v48 = vld [vmem:[%s2] sm:$0x1]
    %v50 = vperm.slane %v48, 0
    %vm52 = vcmask 261120
    %v54 = vsel %vm52, %v36, 0
    %v57 = vsel %vm52, %v37, 0
    %v60 = vsel %vm52, %v38, 0
    %v63 = vsel %vm52, %v39, 0
    %v66 = vsel %vm52, %v40, 0
    %v69 = vsel %vm52, %v41, 0
    %v72 = vsel %vm52, %v42, 0
    %v75 = vsel %vm52, %v43, 0
    %77 = vmatpush.msra.mxu0 0.0
    %78 = vmatpush.msra.mxu0 0.0
    %79 = vmatpush.msra.mxu0 0.0
    %80 = vmatpush.msra.mxu0 0.0
    %81 = vmatpush.msra.mxu0 0.0
    %82 = vmatpush.msra.mxu0 0.0
    %83 = vmatpush.msra.mxu0 0.0
    %84 = vmatpush.msra.mxu0 0.0
    %85 = vmatpush.msra.mxu0 0.0
    %86 = vmatpush.msra.mxu0 0.0
    %87 = vmatpush.msra.mxu0 0.0
    %88 = vmatpush.msra.mxu0 0.0
    %89 = vmatpush.msra.mxu0 %v47
    %90 = vmatpush.msra.mxu0 %v46
    %91 = vmatpush.msra.mxu0 %v45
    %92 = vmatpush.msra.mxu0 %v44
    %93 = vmatmul.f32.gmra.mxu0 %v54
    %v94 = vpop.f32.mrf.mxu0
    %v95 = vadd.f32 %v50, %v94
    %96 = vmatmul.f32.gmra.mxu0 %v57
    %v97 = vpop.f32.mrf.mxu0
    %v98 = vadd.f32 %v50, %v97
    %99 = vmatmul.f32.gmra.mxu0 %v60
    %v100 = vpop.f32.mrf.mxu0
    %v101 = vadd.f32 %v50, %v100
    %102 = vmatmul.f32.gmra.mxu0 %v63
    %v103 = vpop.f32.mrf.mxu0
    %v104 = vadd.f32 %v50, %v103
    %105 = vmatmul.f32.gmra.mxu0 %v66
    %v106 = vpop.f32.mrf.mxu0
    %v107 = vadd.f32 %v50, %v106
    %108 = vmatmul.f32.gmra.mxu0 %v69
    %v109 = vpop.f32.mrf.mxu0
    %v110 = vadd.f32 %v50, %v109
    %111 = vmatmul.f32.gmra.mxu0 %v72
    %v112 = vpop.f32.mrf.mxu0
    %v113 = vadd.f32 %v50, %v112
    %114 = vmatmul.f32.gmra.mxu0 %v75
    %v115 = vpop.f32.mrf.mxu0
    %v116 = vadd.f32 %v50, %v115
    %117 = vdwg.mxu0
    %vm118 = vcmp.ge.f32.partialorder %v95, 0.0
    %vm119 = vcmp.ge.f32.partialorder %v98, 0.0
    %vm120 = vcmp.ge.f32.partialorder %v101, 0.0
    %vm121 = vcmp.ge.f32.partialorder %v104, 0.0
    %vm122 = vcmp.ge.f32.partialorder %v107, 0.0
    %vm123 = vcmp.ge.f32.partialorder %v110, 0.0
    %vm124 = vcmp.ge.f32.partialorder %v113, 0.0
    %vm125 = vcmp.ge.f32.partialorder %v116, 0.0
    %v126 = vmul.f32 %v95, 0.2
    %v127 = vmul.f32 %v98, 0.2
    %v128 = vmul.f32 %v101, 0.2
    %v129 = vmul.f32 %v104, 0.2
    %v130 = vmul.f32 %v107, 0.2
    %v131 = vmul.f32 %v110, 0.2
    %v132 = vmul.f32 %v113, 0.2
    %v133 = vmul.f32 %v116, 0.2
    %v134 = vsel %vm118, %v95, %v126
    %v135 = vsel %vm119, %v98, %v127
    %v136 = vsel %vm120, %v101, %v128
    %v137 = vsel %vm121, %v104, %v129
    %v138 = vsel %vm122, %v107, %v130
    %v139 = vsel %vm123, %v110, %v131
    %v140 = vsel %vm124, %v113, %v132
    %v141 = vsel %vm125, %v116, %v133
    %v142 = vld [vmem:[#allocation2] sm:$0xff]
    %v143 = vld [vmem:[#allocation2 + $0x8] sm:$0xff]
    %v144 = vld [vmem:[#allocation2 + $0x10] sm:$0xff]
    %v145 = vld [vmem:[#allocation2 + $0x18] sm:$0xff]
    %v146 = vld [vmem:[#allocation2 + $0x20] sm:$0xff]
    %v147 = vld [vmem:[#allocation2 + $0x28] sm:$0xff]
    %v148 = vld [vmem:[#allocation2 + $0x30] sm:$0xff]
    %v149 = vld [vmem:[#allocation2 + $0x38] sm:$0xff]
    %v150 = vld [vmem:[#allocation2 + $0x40] sm:$0xff]
    %v151 = vld [vmem:[#allocation2 + $0x48] sm:$0xff]
    %v152 = vld [vmem:[#allocation2 + $0x50] sm:$0xff]
    %v153 = vld [vmem:[#allocation2 + $0x58] sm:$0xff]
    %v154 = vld [vmem:[#allocation2 + $0x60] sm:$0xff]
    %v155 = vld [vmem:[#allocation2 + $0x68] sm:$0xff]
    %v156 = vld [vmem:[#allocation2 + $0x70] sm:$0xff]
    %v157 = vld [vmem:[#allocation2 + $0x78] sm:$0xff]
    %v158 = vld [vmem:[%s4] sm:$0x1]
    %v160 = vperm.slane %v158, 0
    %162 = vmatpush.msra.mxu0 %v157
    %163 = vmatpush.msra.mxu0 %v156
    %164 = vmatpush.msra.mxu0 %v155
    %165 = vmatpush.msra.mxu0 %v154
    %166 = vmatpush.msra.mxu0 %v153
    %167 = vmatpush.msra.mxu0 %v152
    %168 = vmatpush.msra.mxu0 %v151
    %169 = vmatpush.msra.mxu0 %v150
    %170 = vmatpush.msra.mxu0 %v149
    %171 = vmatpush.msra.mxu0 %v148
    %172 = vmatpush.msra.mxu0 %v147
    %173 = vmatpush.msra.mxu0 %v146
    %174 = vmatpush.msra.mxu0 %v145
    %175 = vmatpush.msra.mxu0 %v144
    %176 = vmatpush.msra.mxu0 %v143
    %177 = vmatpush.msra.mxu0 %v142
    %178 = vmatmul.f32.gmra.mxu0 %v134
    %v179 = vpop.f32.mrf.mxu0
    %v180 = vadd.f32 %v160, %v179
    %181 = vmatmul.f32.gmra.mxu0 %v135
    %v182 = vpop.f32.mrf.mxu0
    %v183 = vadd.f32 %v160, %v182
    %184 = vmatmul.f32.gmra.mxu0 %v136
    %v185 = vpop.f32.mrf.mxu0
    %v186 = vadd.f32 %v160, %v185
    %187 = vmatmul.f32.gmra.mxu0 %v137
    %v188 = vpop.f32.mrf.mxu0
    %v189 = vadd.f32 %v160, %v188
    %190 = vmatmul.f32.gmra.mxu0 %v138
    %v191 = vpop.f32.mrf.mxu0
    %v192 = vadd.f32 %v160, %v191
    %193 = vmatmul.f32.gmra.mxu0 %v139
    %v194 = vpop.f32.mrf.mxu0
    %v195 = vadd.f32 %v160, %v194
    %196 = vmatmul.f32.gmra.mxu0 %v140
    %v197 = vpop.f32.mrf.mxu0
    %v198 = vadd.f32 %v160, %v197
    %199 = vmatmul.f32.gmra.mxu0 %v141
    %v200 = vpop.f32.mrf.mxu0
    %v201 = vadd.f32 %v160, %v200
    %202 = vdwg.mxu0
    %v203 = vpack.c.bf16 %v180, %v180
    %v204 = vpack.c.bf16 %v183, %v183
    %v205 = vpack.c.bf16 %v186, %v186
    %v206 = vpack.c.bf16 %v189, %v189
    %v207 = vpack.c.bf16 %v192, %v192
    %v208 = vpack.c.bf16 %v195, %v195
    %v209 = vpack.c.bf16 %v198, %v198
    %v210 = vpack.c.bf16 %v201, %v201
    %211 = vst [vmem:[%s5] sm:$0xf] %v203
    %212 = vst [vmem:[%s5 + $0x4] sm:$0xf] %v204
    %213 = vst [vmem:[%s5 + $0x8] sm:$0xf] %v205
    %214 = vst [vmem:[%s5 + $0xc] sm:$0xf] %v206
    %215 = vst [vmem:[%s5 + $0x10] sm:$0xf] %v207
    %216 = vst [vmem:[%s5 + $0x14] sm:$0xf] %v208
    %217 = vst [vmem:[%s5 + $0x18] sm:$0xf] %v209
    %218 = vst [vmem:[%s5 + $0x1c] sm:$0xf] %v210
    // Predicated region
    $region26: #{hgnng_conv_forward.2} parent=1 // pred_check
      _
    $region27: #{hgnng_conv_forward.2} parent=1 // pred_check_branch
      %220 = sbr.rel (0) target = $region29
    $region28: #{hgnng_conv_forward.2} parent=1 // pred_region
      _
    $region29: #{hgnng_conv_forward.2} parent=1 // pred_fallthru
      _
    // Predicated region
    $region30: #{hgnng_conv_forward.2} parent=1 // pred_check
      _
    $region31: #{hgnng_conv_forward.2} parent=1 // pred_check_branch
      %222 = sbr.rel (0) target = $region33
    $region32: #{hgnng_conv_forward.2} parent=1 // pred_region
      _
    $region33: #{hgnng_conv_forward.2} parent=1 // pred_fallthru
      _
    %223 = vsyncpa [#allocation3], 1

// kernel: hgnng_conv_forward.3
$region0: #{hgnng_conv_forward.3}
  #allocation0 [shape = 'u32[]', space=smem, size = 0x4, offset = 0x4, fixed_abs, tag = 'smem constant byte address 0x4 - core index']
  #allocation1 [shape = 'u32[72,128]{1,0:T(1,128)}', space=vmem, size = 0x9000, scoped, tag = 'internal scratch']
  #allocation2 [shape = 'f32[64,128]{1,0:T(8,128)}', space=vmem, size = 0x8000, scoped, tag = 'scratch operand']
  %s0 = inlined_call_operand.vmem [shape: f32[2], index: 0, kind: input, shape index: {}]
  %s1 = inlined_call_operand.vmem [shape: bf16[64,64], index: 1, kind: input, shape index: {}]
  %s2 = inlined_call_operand.vmem [shape: bf16[64,128], index: 2, kind: input, shape index: {}, may-alias: {2,3}]
  %s3 = inlined_call_operand.vmem [shape: bf16[64,128], index: 3, kind: input, shape index: {}, may-alias: {2,3}]
  %s4 = inlined_call_operand.vmem [shape: f32[64,128], index: 4, kind: output, shape index: {}]
  %s5 = sld [smem:[#allocation0]]
  $region38: #{hgnng_conv_forward.3} parent=0
    _
  %s7 = ssub.s32 1, %s5
  %s8 = scalar_select 0, %s7, %s5
  $region1: #{hgnng_conv_forward.3} parent=0
    #allocation3 [shape = 'u8[512]{0}', space=smem, size = 0x200, scoped, tag = 'input window, operand 0, single buffered']
    #allocation4 [shape = 's32[1]{0}', space=sflag, size = 0x4, scoped, tag = 'scoped memory for hgnng_conv_forward.3']
    %9 = vsyncpa [#allocation4], 0
    // Predicated region
    $region2: #{hgnng_conv_forward.3} parent=1 // pred_check
      _
    $region3: #{hgnng_conv_forward.3} parent=1 // pred_check_branch
      %11 = sbr.rel (0) target = $region5
    $region4: #{hgnng_conv_forward.3} parent=1 // pred_region
      %13 = vsyncadd [#allocation4], 0
      %s15 = sshll.u32 %s0, 4
      %s16 = int_to_ptr.vmem [resolvable:$true] %s15
      %18 = dma.vmem_to_smem %s16, 16, [#allocation3], [#allocation4]
    $region5: #{hgnng_conv_forward.3} parent=1 // pred_fallthru
      _
    // Predicated region
    $region6: #{hgnng_conv_forward.3} parent=1 // pred_check
      _
    $region7: #{hgnng_conv_forward.3} parent=1 // pred_check_branch
      %20 = sbr.rel (0) target = $region9
    $region8: #{hgnng_conv_forward.3} parent=1 // pred_region
      _
    $region9: #{hgnng_conv_forward.3} parent=1 // pred_fallthru
      _
    // Predicated region
    $region10: #{hgnng_conv_forward.3} parent=1 // pred_check
      _
    $region11: #{hgnng_conv_forward.3} parent=1 // pred_check_branch
      %22 = sbr.rel (0) target = $region13
    $region12: #{hgnng_conv_forward.3} parent=1 // pred_region
      _
    $region13: #{hgnng_conv_forward.3} parent=1 // pred_fallthru
      _
    // Predicated region
    $region14: #{hgnng_conv_forward.3} parent=1 // pred_check
      _
    $region15: #{hgnng_conv_forward.3} parent=1 // pred_check_branch
      %24 = sbr.rel (0) target = $region17
    $region16: #{hgnng_conv_forward.3} parent=1 // pred_region
      _
    $region17: #{hgnng_conv_forward.3} parent=1 // pred_fallthru
      _
    // Predicated region
    $region18: #{hgnng_conv_forward.3} parent=1 // pred_check
      _
    $region19: #{hgnng_conv_forward.3} parent=1 // pred_check_branch
      %26 = sbr.rel (0) target = $region21
    $region20: #{hgnng_conv_forward.3} parent=1 // pred_region
      %28 = dma.done [#allocation4], 16
    $region21: #{hgnng_conv_forward.3} parent=1 // pred_fallthru
      _
    %29 = sfence
    %p31 = scmp.eq.s32.totalorder 0, 0
    // Predicated region
    $region22: #{hgnng_conv_forward.3} parent=1 // pred_check
      %p32 = pneg %p31
    $region23: #{hgnng_conv_forward.3} parent=1 // pred_check_branch
      %34 = sbr.rel (%p32) target = $region25
    $region24: #{hgnng_conv_forward.3} parent=1 // pred_region
      %35 = vst [vmem:[#allocation2] sm:$0xff] 0.0
      %36 = vst [vmem:[#allocation2 + $0x8] sm:$0xff] 0.0
      %37 = vst [vmem:[#allocation2 + $0x10] sm:$0xff] 0.0
      %38 = vst [vmem:[#allocation2 + $0x18] sm:$0xff] 0.0
      %39 = vst [vmem:[#allocation2 + $0x20] sm:$0xff] 0.0
      %40 = vst [vmem:[#allocation2 + $0x28] sm:$0xff] 0.0
      %41 = vst [vmem:[#allocation2 + $0x30] sm:$0xff] 0.0
      %42 = vst [vmem:[#allocation2 + $0x38] sm:$0xff] 0.0
    $region25: #{hgnng_conv_forward.3} parent=1 // pred_fallthru
      _
    %v43 = vld [vmem:[#allocation2] sm:$0xff]
    %v44 = vld [vmem:[#allocation2 + $0x8] sm:$0xff]
    %v45 = vld [vmem:[#allocation2 + $0x10] sm:$0xff]
    %v46 = vld [vmem:[#allocation2 + $0x18] sm:$0xff]
    %v47 = vld [vmem:[#allocation2 + $0x20] sm:$0xff]
    %v48 = vld [vmem:[#allocation2 + $0x28] sm:$0xff]
    %v49 = vld [vmem:[#allocation2 + $0x30] sm:$0xff]
    %v50 = vld [vmem:[#allocation2 + $0x38] sm:$0xff]
    %v51 = vld [vmem:[%s1] sm:$0xf]
    %v52 = vld [vmem:[%s1 + $0x4] sm:$0xf]
    %v53 = vld [vmem:[%s1 + $0x8] sm:$0xf]
    %v54 = vld [vmem:[%s1 + $0xc] sm:$0xf]
    %v55 = vld [vmem:[%s1 + $0x10] sm:$0xf]
    %v56 = vld [vmem:[%s1 + $0x14] sm:$0xf]
    %v57 = vld [vmem:[%s1 + $0x18] sm:$0xf]
    %v58 = vld [vmem:[%s1 + $0x1c] sm:$0xf]
    %v59 = vld [vmem:[%s2] sm:$0xf]
    %v60 = vld [vmem:[%s2 + $0x4] sm:$0xf]
    %v61 = vld [vmem:[%s2 + $0x8] sm:$0xf]
    %v62 = vld [vmem:[%s2 + $0xc] sm:$0xf]
    %v63 = vld [vmem:[%s2 + $0x10] sm:$0xf]
    %v64 = vld [vmem:[%s2 + $0x14] sm:$0xf]
    %v65 = vld [vmem:[%s2 + $0x18] sm:$0xf]
    %v66 = vld [vmem:[%s2 + $0x1c] sm:$0xf]
    %v75 = vunpack.c.l.b16 %v51
    %v76 = vunpack.c.l.b16 %v52
    %v77 = vunpack.c.l.b16 %v53
    %v78 = vunpack.c.l.b16 %v54
    %v79 = vunpack.c.l.b16 %v55
    %v80 = vunpack.c.l.b16 %v56
    %v81 = vunpack.c.l.b16 %v57
    %v82 = vunpack.c.l.b16 %v58
    %v83 = vpack.c.b16 %v76, %v75
    %v84 = vpack.c.b16 %v78, %v77
    %v85 = vpack.c.b16 %v80, %v79
    %v86 = vpack.c.b16 %v82, %v81
    %v95 = vunpack.c.l.b16 %v59
    %v96 = vunpack.c.l.b16 %v60
    %v97 = vunpack.c.l.b16 %v61
    %v98 = vunpack.c.l.b16 %v62
    %v99 = vunpack.c.l.b16 %v63
    %v100 = vunpack.c.l.b16 %v64
    %v101 = vunpack.c.l.b16 %v65
    %v102 = vunpack.c.l.b16 %v66
    %v103 = vpack.c.b16 %v96, %v95
    %v104 = vpack.c.b16 %v98, %v97
    %v105 = vpack.c.b16 %v100, %v99
    %v106 = vpack.c.b16 %v102, %v101
    %vm111 = vcmask 523264
    %v113 = vsel %vm111, %v83, 0
    %v116 = vsel %vm111, %v84, 0
    %v119 = vsel %vm111, %v85, 0
    %v122 = vsel %vm111, %v86, 0
    %124 = vmatpush.bf16.msra.mxu0 0
    %125 = vmatpush.bf16.msra.mxu0 0
    %126 = vmatpush.bf16.msra.mxu0 0
    %127 = vmatpush.bf16.msra.mxu0 0
    %128 = vmatpush.bf16.msra.mxu0 %v106
    %129 = vmatpush.bf16.msra.mxu0 %v105
    %130 = vmatpush.bf16.msra.mxu0 %v104
    %131 = vmatpush.bf16.msra.mxu0 %v103
    %132 = vmatmul.bf16.gmra.mxu0 %v113
    %v133 = vpop.f32.mrf.mxu0
    %v134 = vadd.f32 0.0, %v133
    %v135 = vpop.f32.mrf.mxu0
    %v136 = vadd.f32 0.0, %v135
    %137 = vmatmul.bf16.gmra.mxu0 %v116
    %v138 = vpop.f32.mrf.mxu0
    %v139 = vadd.f32 0.0, %v138
    %v140 = vpop.f32.mrf.mxu0
    %v141 = vadd.f32 0.0, %v140
    %142 = vmatmul.bf16.gmra.mxu0 %v119
    %v143 = vpop.f32.mrf.mxu0
    %v144 = vadd.f32 0.0, %v143
    %v145 = vpop.f32.mrf.mxu0
    %v146 = vadd.f32 0.0, %v145
    %147 = vmatmul.bf16.gmra.mxu0 %v122
    %v148 = vpop.f32.mrf.mxu0
    %v149 = vadd.f32 0.0, %v148
    %v150 = vpop.f32.mrf.mxu0
    %v151 = vadd.f32 0.0, %v150
    %152 = vdwg.mxu0
    %v153 = vadd.f32 %v43, %v134
    %v154 = vadd.f32 %v44, %v136
    %v155 = vadd.f32 %v45, %v139
    %v156 = vadd.f32 %v46, %v141
    %v157 = vadd.f32 %v47, %v144
    %v158 = vadd.f32 %v48, %v146
    %v159 = vadd.f32 %v49, %v149
    %v160 = vadd.f32 %v50, %v151
    %161 = vst [vmem:[#allocation2] sm:$0xff] %v153
    %162 = vst [vmem:[#allocation2 + $0x8] sm:$0xff] %v154
    %163 = vst [vmem:[#allocation2 + $0x10] sm:$0xff] %v155
    %164 = vst [vmem:[#allocation2 + $0x18] sm:$0xff] %v156
    %165 = vst [vmem:[#allocation2 + $0x20] sm:$0xff] %v157
    %166 = vst [vmem:[#allocation2 + $0x28] sm:$0xff] %v158
    %167 = vst [vmem:[#allocation2 + $0x30] sm:$0xff] %v159
    %168 = vst [vmem:[#allocation2 + $0x38] sm:$0xff] %v160
    // Predicated region
    $region26: #{hgnng_conv_forward.3} parent=1 // pred_check
      %p169 = pneg %p31
    $region27: #{hgnng_conv_forward.3} parent=1 // pred_check_branch
      %171 = sbr.rel (%p169) target = $region29
    $region28: #{hgnng_conv_forward.3} parent=1 // pred_region
      %s172 = sld [smem:[#allocation3]]
      %v173 = vld [vmem:[#allocation2] sm:$0xff]
      %v174 = vld [vmem:[#allocation2 + $0x8] sm:$0xff]
      %v175 = vld [vmem:[#allocation2 + $0x10] sm:$0xff]
      %v176 = vld [vmem:[#allocation2 + $0x18] sm:$0xff]
      %v177 = vld [vmem:[#allocation2 + $0x20] sm:$0xff]
      %v178 = vld [vmem:[#allocation2 + $0x28] sm:$0xff]
      %v179 = vld [vmem:[#allocation2 + $0x30] sm:$0xff]
      %v180 = vld [vmem:[#allocation2 + $0x38] sm:$0xff]
      %v181 = vstv %s172
      %v182 = vmul.f32 %v181, %v173
      %v183 = vmul.f32 %v181, %v174
      %v184 = vmul.f32 %v181, %v175
      %v185 = vmul.f32 %v181, %v176
      %v186 = vmul.f32 %v181, %v177
      %v187 = vmul.f32 %v181, %v178
      %v188 = vmul.f32 %v181, %v179
      %v189 = vmul.f32 %v181, %v180
      %s190 = sld [smem:[#allocation3 + $0x1]]
      %v191 = vld [vmem:[%s3] sm:$0xf]
      %v192 = vld [vmem:[%s3 + $0x4] sm:$0xf]
      %v193 = vld [vmem:[%s3 + $0x8] sm:$0xf]
      %v194 = vld [vmem:[%s3 + $0xc] sm:$0xf]
      %v195 = vld [vmem:[%s3 + $0x10] sm:$0xf]
      %v196 = vld [vmem:[%s3 + $0x14] sm:$0xf]
      %v197 = vld [vmem:[%s3 + $0x18] sm:$0xf]
      %v198 = vld [vmem:[%s3 + $0x1c] sm:$0xf]
      %v199 = vunpack.c.l.bf16 %v191
      %v200 = vunpack.c.l.bf16 %v192
      %v201 = vunpack.c.l.bf16 %v193
      %v202 = vunpack.c.l.bf16 %v194
      %v203 = vunpack.c.l.bf16 %v195
      %v204 = vunpack.c.l.bf16 %v196
      %v205 = vunpack.c.l.bf16 %v197
      %v206 = vunpack.c.l.bf16 %v198
      %v207 = vstv %s190
      %v208 = vmul.f32 %v207, %v199
      %v209 = vmul.f32 %v207, %v200
      %v210 = vmul.f32 %v207, %v201
      %v211 = vmul.f32 %v207, %v202
      %v212 = vmul.f32 %v207, %v203
      %v213 = vmul.f32 %v207, %v204
      %v214 = vmul.f32 %v207, %v205
      %v215 = vmul.f32 %v207, %v206
      %v216 = vadd.f32 %v182, %v208
      %v217 = vadd.f32 %v183, %v209
      %v218 = vadd.f32 %v184, %v210
      %v219 = vadd.f32 %v185, %v211
      %v220 = vadd.f32 %v186, %v212
      %v221 = vadd.f32 %v187, %v213
      %v222 = vadd.f32 %v188, %v214
      %v223 = vadd.f32 %v189, %v215
      %vm224 = vcmp.ge.f32.partialorder %v216, 0.0
      %vm225 = vcmp.ge.f32.partialorder %v217, 0.0
      %vm226 = vcmp.ge.f32.partialorder %v218, 0.0
      %vm227 = vcmp.ge.f32.partialorder %v219, 0.0
      %vm228 = vcmp.ge.f32.partialorder %v220, 0.0
      %vm229 = vcmp.ge.f32.partialorder %v221, 0.0
      %vm230 = vcmp.ge.f32.partialorder %v222, 0.0
      %vm231 = vcmp.ge.f32.partialorder %v223, 0.0
      %v232 = vmul.f32 %v216, 0.2
      %v233 = vmul.f32 %v217, 0.2
      %v234 = vmul.f32 %v218, 0.2
      %v235 = vmul.f32 %v219, 0.2
      %v236 = vmul.f32 %v220, 0.2
      %v237 = vmul.f32 %v221, 0.2
      %v238 = vmul.f32 %v222, 0.2
      %v239 = vmul.f32 %v223, 0.2
      %v240 = vsel %vm224, %v216, %v232
      %v241 = vsel %vm225, %v217, %v233
      %v242 = vsel %vm226, %v218, %v234
      %v243 = vsel %vm227, %v219, %v235
      %v244 = vsel %vm228, %v220, %v236
      %v245 = vsel %vm229, %v221, %v237
      %v246 = vsel %vm230, %v222, %v238
      %v247 = vsel %vm231, %v223, %v239
      %248 = vst [vmem:[%s4] sm:$0xff] %v240
      %249 = vst [vmem:[%s4 + $0x8] sm:$0xff] %v241
      %250 = vst [vmem:[%s4 + $0x10] sm:$0xff] %v242
      %251 = vst [vmem:[%s4 + $0x18] sm:$0xff] %v243
      %252 = vst [vmem:[%s4 + $0x20] sm:$0xff] %v244
      %253 = vst [vmem:[%s4 + $0x28] sm:$0xff] %v245
      %254 = vst [vmem:[%s4 + $0x30] sm:$0xff] %v246
      %255 = vst [vmem:[%s4 + $0x38] sm:$0xff] %v247
    $region29: #{hgnng_conv_forward.3} parent=1 // pred_fallthru
      _
    // Predicated region
    $region30: #{hgnng_conv_forward.3} parent=1 // pred_check
      _
    $region31: #{hgnng_conv_forward.3} parent=1 // pred_check_branch
      %257 = sbr.rel (0) target = $region33
    $region32: #{hgnng_conv_forward.3} parent=1 // pred_region
      _
    $region33: #{hgnng_conv_forward.3} parent=1 // pred_fallthru
      _
    // Predicated region
    $region34: #{hgnng_conv_forward.3} parent=1 // pred_check
      _
    $region35: #{hgnng_conv_forward.3} parent=1 // pred_check_branch
      %259 = sbr.rel (0) target = $region37
    $region36: #{hgnng_conv_forward.3} parent=1 // pred_region
      _
    $region37: #{hgnng_conv_forward.3} parent=1 // pred_fallthru
      _
    %260 = vsyncpa [#allocation4], 1

</llo_original>
